<compile_context>
chip_gen: v7x
topology: tpu7x:2x2x1
jax: 0.10.0
libtpu: 0.0.40
codegen_flags: <defaults>
</compile_context>

<pallas_src>
import functools

import jax
import jax.numpy as jnp
from jax import lax
from jax.experimental import pallas as pl
from jax.experimental.pallas import tpu as pltpu

LANES = 128
SUBLANES = 8
CHUNK_ROWS = 512                      # 512*128*4 B = 256 KiB per input sub-slice
VMEM_LIMIT_BYTES = 32 * 1024 * 1024   # <= default/physical on v5e, v6e and v7x


def _round_up(x, m):
    return ((x + m - 1) // m) * m


def _is_v7x():
    try:
        kind = jax.devices()[0].device_kind.lower()
    except Exception:
        return False
    return ("v7" in kind) or ("7x" in kind)


# ---------------------------------------------------------------------------
# Kernel
# ---------------------------------------------------------------------------
def _mse_sum_kernel(r_ref, x_ref, o_ref, acc_ref, *,
                    block_rows, chunk_rows, steps_per_core, total_rows):
    """Per-core partial sum of (recon - x)^2 into an (8,128) accumulator."""
    p = pl.program_id(0)              # core-split axis
    i = pl.program_id(1)              # reduction axis ("arbitrary")

    @pl.when(i == 0)
    def _():
        acc_ref[...] = jnp.zeros_like(acc_ref)

    logical_block = p * steps_per_core + i
    row0 = logical_block * block_rows
    n_chunks = block_rows // chunk_rows

    def chunk_partial(j, masked):
        start = pl.multiple_of(j * chunk_rows, chunk_rows)
        d = (r_ref[pl.ds(start, chunk_rows), :].astype(jnp.float32)
             - x_ref[pl.ds(start, chunk_rows), :].astype(jnp.float32))
        sq = d * d
        if masked:
            # Rows past the logical end of the array hold garbage (ragged last
            # block / clamped duplicate blocks); zero them.  select is NaN-safe.
            row_idx = (row0 + start
                       + lax.broadcasted_iota(jnp.int32, sq.shape, 0))
            sq = jnp.where(row_idx < total_rows, sq, 0.0)
        # Fold (chunk_rows,128) -> (8,128) with pure VPU vreg adds; the reshape
        # groups whole (8,128) tiles so it does not cross tile boundaries.
        return jnp.sum(sq.reshape(chunk_rows // SUBLANES, SUBLANES, LANES),
                       axis=0)

    def accumulate(masked):
        def body(j, acc):
            return acc + chunk_partial(j, masked)
        acc_ref[...] = lax.fori_loop(0, n_chunks, body, acc_ref[...],
                                     unroll=True)

    # Fast path: interior blocks need no per-element masking.
    @pl.when(row0 + block_rows <= total_rows)
    def _():
        accumulate(masked=False)

    # Slow path: ragged last block; clamped duplicate blocks have
    # row0 >= total_rows, so the same predicate covers them (they sum to 0).
    @pl.when(row0 + block_rows > total_rows)
    def _():
        accumulate(masked=True)

    @pl.when(i == pl.num_programs(1) - 1)
    def _():
        o_ref[0] = acc_ref[...]


# ---------------------------------------------------------------------------
# Wrappers
# ---------------------------------------------------------------------------
def _mse_sum_pallas(recon_x, x):
    """sum((recon_x - x)^2) over all elements."""
    r = jnp.ravel(recon_x)            # metadata-only reshape, no dtype cast
    xf = jnp.ravel(x)
    n = r.shape[0]

    if n % LANES != 0:
        # Padding the big tensors would materialize a full HBM read+write copy
        # of each — more traffic than the reduction itself.  A plain XLA
        # reduction reads each tensor exactly once, so it is the faster choice
        # for this (rare) misaligned case.
        # TODO(synk): in-kernel handling of a flat length that is not a
        # multiple of 128 (lane-masked 1D tail) to keep everything in Pallas.
        d = r.astype(jnp.float32) - xf.astype(jnp.float32)
        return jnp.sum(d * d)

    rows = n // LANES
    r2d = r.reshape(rows, LANES)
    x2d = xf.reshape(rows, LANES)

    v7x = _is_v7x()
    target_rows = 8192 if v7x else 4096
    block_rows = min(target_rows, _round_up(rows, SUBLANES))
    chunk_rows = CHUNK_ROWS if block_rows % CHUNK_ROWS == 0 else block_rows

    num_blocks = pl.cdiv(rows, block_rows)
    # Split across TensorCores only where a second core exists (v7x).
    nc = 2 if (v7x and num_blocks >= 2) else 1
    steps_per_core = pl.cdiv(num_blocks, nc)

    def in_map(p, i):
        blk = p * steps_per_core + i
        # Clamp duplicate out-of-range blocks (uneven core split); the in-kernel
        # row mask zeroes their contribution.
        return (jnp.minimum(blk, num_blocks - 1), 0)

    kernel = functools.partial(
        _mse_sum_kernel,
        block_rows=block_rows,
        chunk_rows=chunk_rows,
        steps_per_core=steps_per_core,
        total_rows=rows,
    )

    if nc == 2:
        semantics = (pltpu.CORE_PARALLEL, pltpu.ARBITRARY)
    else:
        semantics = ("arbitrary", "arbitrary")

    partials = pl.pallas_call(
        kernel,
        out_shape=jax.ShapeDtypeStruct((nc, SUBLANES, LANES), jnp.float32),
        grid_spec=pltpu.PrefetchScalarGridSpec(
            num_scalar_prefetch=0,
            grid=(nc, steps_per_core),
            in_specs=[
                pl.BlockSpec((block_rows, LANES), in_map),
                pl.BlockSpec((block_rows, LANES), in_map),
            ],
            out_specs=pl.BlockSpec((1, SUBLANES, LANES),
                                   lambda p, i: (p, 0, 0)),
            scratch_shapes=[pltpu.VMEM((SUBLANES, LANES), jnp.float32)],
        ),
        compiler_params=pltpu.CompilerParams(
            dimension_semantics=semantics,
            vmem_limit_bytes=VMEM_LIMIT_BYTES),
    )(r2d, x2d)

    # Tiny final reduce (nc * 8 * 128 f32) — negligible, let XLA fuse it.
    return jnp.sum(partials)


@jax.jit
def vae_loss(recon_x, x, mu, logvar):
    """MSE(reduction='sum') + KLD, matching PyTorch VAELoss.forward."""
    mse = _mse_sum_pallas(recon_x, x)

    # KLD on the tiny (B, latent) tensors: plain JAX (fused by XLA).
    mu32 = mu.astype(jnp.float32)
    lv32 = logvar.astype(jnp.float32)
    kld = -0.5 * jnp.sum(1.0 + lv32 - mu32 * mu32 - jnp.exp(lv32))

    return mse + kld


# ---------------------------------------------------------------------------
# Demo / self-check
# ---------------------------------------------------------------------------
if __name__ == "__main__":
    key = jax.random.PRNGKey(0)
    k1, k2, k3, k4 = jax.random.split(key, 4)

    B, C, H, W = 2, 4, 16, 16   # NCHW, like the PyTorch conv convention
    LATENT = 32

    x = jax.random.normal(k1, (B, C, H, W), dtype=jnp.float32)
    recon_x = jax.random.normal(k2, (B, C, H, W), dtype=jnp.float32)
    mu = jax.random.normal(k3, (B, LATENT), dtype=jnp.float32) * 0.5
    logvar = jax.random.normal(k4, (B, LATENT), dtype=jnp.float32) * 0.1

    loss = vae_loss(recon_x, x, mu, logvar)
    jax.block_until_ready(loss)

    # Pure-JAX reference (same math as the PyTorch module)
    ref_mse = jnp.sum((recon_x - x) ** 2)
    ref_kld = -0.5 * jnp.sum(1.0 + logvar - mu ** 2 - jnp.exp(logvar))
    ref = ref_mse + ref_kld
    assert jnp.allclose(loss, ref, rtol=1e-5, atol=1e-5), (loss, ref)

    print("KERNEL_OK")
</pallas_src>

<mosaic_0001>
module attributes {stable_mosaic.version = 11 : i64} {
  func.func @_mse_sum_kernel(%arg0: i32, %arg1: i32, %arg2: memref<16x128xf32, #tpu.memory_space<vmem>>, %arg3: memref<16x128xf32, #tpu.memory_space<vmem>>, %arg4: memref<1x8x128xf32, #tpu.memory_space<vmem>>, %arg5: memref<8x128xf32, #tpu.memory_space<vmem>>) attributes {dimension_semantics = [#tpu.dimension_semantics<arbitrary>, #tpu.dimension_semantics<arbitrary>], iteration_bounds = array<i64: 1, 1>, scalar_prefetch = 0 : i64, scratch_operands = 1 : i64, tpu.core_type = #tpu.core_type<tc>, window_params = [{transform_indices = @transform_0, window_bounds = array<i64: 16, 128>}, {transform_indices = @transform_1, window_bounds = array<i64: 16, 128>}, {transform_indices = @transform_2, window_bounds = array<i64: 1, 8, 128>}]} {
    %c0_i32 = arith.constant 0 : i32
    %0 = arith.cmpi eq, %arg1, %c0_i32 : i32
    %1 = arith.extui %0 : i1 to i32
    %c0_i32_0 = arith.constant 0 : i32
    %2 = arith.cmpi ne, %1, %c0_i32_0 : i32
    scf.if %2 {
      %cst = arith.constant 0.000000e+00 : f32
      %17 = vector.broadcast %cst : f32 to vector<8x128xf32>
      %c0 = arith.constant 0 : index
      %c0_9 = arith.constant 0 : index
      %18 = vector.load %arg5[%c0, %c0_9] : memref<8x128xf32, #tpu.memory_space<vmem>>, vector<8x128xf32>
      tpu.vector_store %arg5[%c0, %c0_9], %17 {strides = array<i32>} : memref<8x128xf32, #tpu.memory_space<vmem>>, vector<8x128xf32>,
    } else {
    }
    %c1_i32 = arith.constant 1 : i32
    %3 = arith.muli %arg0, %c1_i32 : i32
    %4 = arith.addi %3, %arg1 : i32
    %c16_i32 = arith.constant 16 : i32
    %5 = arith.muli %4, %c16_i32 : i32
    %c16_i32_1 = arith.constant 16 : i32
    %6 = arith.addi %5, %c16_i32_1 : i32
    %c16_i32_2 = arith.constant 16 : i32
    %7 = arith.cmpi sle, %6, %c16_i32_2 : i32
    %8 = arith.extui %7 : i1 to i32
    %c0_i32_3 = arith.constant 0 : i32
    %9 = arith.cmpi ne, %8, %c0_i32_3 : i32
    scf.if %9 {
      %c0 = arith.constant 0 : index
      %c0_9 = arith.constant 0 : index
      %17 = vector.load %arg5[%c0, %c0_9] : memref<8x128xf32, #tpu.memory_space<vmem>>, vector<8x128xf32>
      %c0_i32_10 = arith.constant 0 : i32
      %c16_i32_11 = arith.constant 16 : i32
      %18 = arith.muli %c0_i32_10, %c16_i32_11 : i32
      %19 = tpu.assume_multiple %18, 16 : i32
      %20 = arith.index_cast %19 : i32 to index
      %c0_12 = arith.constant 0 : index
      %21 = vector.load %arg2[%20, %c0_12] : memref<16x128xf32, #tpu.memory_space<vmem>>, vector<16x128xf32>
      %22 = arith.index_cast %19 : i32 to index
      %c0_13 = arith.constant 0 : index
      %23 = vector.load %arg3[%22, %c0_13] : memref<16x128xf32, #tpu.memory_space<vmem>>, vector<16x128xf32>
      %24 = arith.subf %21, %23 : vector<16x128xf32>
      %25 = arith.mulf %24, %24 : vector<16x128xf32>
      %26 = vector.shape_cast %25 : vector<16x128xf32> to vector<2x8x128xf32>
      %cst = arith.constant dense<0.000000e+00> : vector<8x128xf32>
      %27 = vector.multi_reduction <add>, %26, %cst [0] : vector<2x8x128xf32> to vector<8x128xf32>
      %28 = arith.addf %17, %27 : vector<8x128xf32>
      %c1_i32_14 = arith.constant 1 : i32
      %c0_15 = arith.constant 0 : index
      %c0_16 = arith.constant 0 : index
      %29 = vector.load %arg5[%c0_15, %c0_16] : memref<8x128xf32, #tpu.memory_space<vmem>>, vector<8x128xf32>
      tpu.vector_store %arg5[%c0_15, %c0_16], %28 {strides = array<i32>} : memref<8x128xf32, #tpu.memory_space<vmem>>, vector<8x128xf32>,
    } else {
    }
    %c16_i32_4 = arith.constant 16 : i32
    %10 = arith.addi %5, %c16_i32_4 : i32
    %c16_i32_5 = arith.constant 16 : i32
    %11 = arith.cmpi sgt, %10, %c16_i32_5 : i32
    %12 = arith.extui %11 : i1 to i32
    %c0_i32_6 = arith.constant 0 : i32
    %13 = arith.cmpi ne, %12, %c0_i32_6 : i32
    scf.if %13 {
      %c0 = arith.constant 0 : index
      %c0_9 = arith.constant 0 : index
      %17 = vector.load %arg5[%c0, %c0_9] : memref<8x128xf32, #tpu.memory_space<vmem>>, vector<8x128xf32>
      %c0_i32_10 = arith.constant 0 : i32
      %c16_i32_11 = arith.constant 16 : i32
      %18 = arith.muli %c0_i32_10, %c16_i32_11 : i32
      %19 = tpu.assume_multiple %18, 16 : i32
      %20 = arith.index_cast %19 : i32 to index
      %c0_12 = arith.constant 0 : index
      %21 = vector.load %arg2[%20, %c0_12] : memref<16x128xf32, #tpu.memory_space<vmem>>, vector<16x128xf32>
      %22 = arith.index_cast %19 : i32 to index
      %c0_13 = arith.constant 0 : index
      %23 = vector.load %arg3[%22, %c0_13] : memref<16x128xf32, #tpu.memory_space<vmem>>, vector<16x128xf32>
      %24 = arith.subf %21, %23 : vector<16x128xf32>
      %25 = arith.mulf %24, %24 : vector<16x128xf32>
      %26 = arith.addi %5, %19 : i32
      %27 = tpu.iota {dimensions = array<i32: 0>} : vector<16x128xi32>
      %28 = vector.broadcast %26 : i32 to vector<16x128xi32>
      %29 = arith.addi %28, %27 : vector<16x128xi32>
      %c16_i32_14 = arith.constant 16 : i32
      %30 = vector.broadcast %c16_i32_14 : i32 to vector<16x128xi32>
      %31 = arith.cmpi slt, %29, %30 : vector<16x128xi32>
      %cst = arith.constant 0.000000e+00 : f32
      %32 = vector.broadcast %cst : f32 to vector<16x128xf32>
      %33 = arith.select %31, %25, %32 : vector<16x128xi1>, vector<16x128xf32>
      %34 = vector.shape_cast %33 : vector<16x128xf32> to vector<2x8x128xf32>
      %cst_15 = arith.constant dense<0.000000e+00> : vector<8x128xf32>
      %35 = vector.multi_reduction <add>, %34, %cst_15 [0] : vector<2x8x128xf32> to vector<8x128xf32>
      %36 = arith.addf %17, %35 : vector<8x128xf32>
      %c1_i32_16 = arith.constant 1 : i32
      %c0_17 = arith.constant 0 : index
      %c0_18 = arith.constant 0 : index
      %37 = vector.load %arg5[%c0_17, %c0_18] : memref<8x128xf32, #tpu.memory_space<vmem>>, vector<8x128xf32>
      tpu.vector_store %arg5[%c0_17, %c0_18], %36 {strides = array<i32>} : memref<8x128xf32, #tpu.memory_space<vmem>>, vector<8x128xf32>,
    } else {
    }
    %c0_i32_7 = arith.constant 0 : i32
    %14 = arith.cmpi eq, %arg1, %c0_i32_7 : i32
    %15 = arith.extui %14 : i1 to i32
    %c0_i32_8 = arith.constant 0 : i32
    %16 = arith.cmpi ne, %15, %c0_i32_8 : i32
    scf.if %16 {
      %c0 = arith.constant 0 : index
      %c0_9 = arith.constant 0 : index
      %17 = vector.load %arg5[%c0, %c0_9] : memref<8x128xf32, #tpu.memory_space<vmem>>, vector<8x128xf32>
      %c0_10 = arith.constant 0 : index
      %c0_11 = arith.constant 0 : index
      %c0_12 = arith.constant 0 : index
      %18 = vector.load %arg4[%c0_10, %c0_11, %c0_12] : memref<1x8x128xf32, #tpu.memory_space<vmem>>, vector<1x8x128xf32>
      %19 = vector.shape_cast %18 : vector<1x8x128xf32> to vector<8x128xf32>
      %20 = vector.shape_cast %17 : vector<8x128xf32> to vector<1x8x128xf32>
      tpu.vector_store %arg4[%c0_10, %c0_11, %c0_12], %20 {strides = array<i32>} : memref<1x8x128xf32, #tpu.memory_space<vmem>>, vector<1x8x128xf32>,
    } else {
    }
    return
  }
  func.func @transform_0(%arg0: i32, %arg1: i32) -> (i32, i32) {
    %c1_i32 = arith.constant 1 : i32
    %0 = arith.muli %arg0, %c1_i32 : i32
    %1 = arith.addi %0, %arg1 : i32
    %c0_i32 = arith.constant 0 : i32
    %2 = arith.minsi %1, %c0_i32 : i32
    %c0_i32_0 = arith.constant 0 : i32
    %c0_i32_1 = arith.constant 0 : i32
    return %2, %c0_i32_0 : i32, i32
  }
  func.func @transform_1(%arg0: i32, %arg1: i32) -> (i32, i32) {
    %c1_i32 = arith.constant 1 : i32
    %0 = arith.muli %arg0, %c1_i32 : i32
    %1 = arith.addi %0, %arg1 : i32
    %c0_i32 = arith.constant 0 : i32
    %2 = arith.minsi %1, %c0_i32 : i32
    %c0_i32_0 = arith.constant 0 : i32
    %c0_i32_1 = arith.constant 0 : i32
    return %2, %c0_i32_0 : i32, i32
  }
  func.func @transform_2(%arg0: i32, %arg1: i32) -> (i32, i32, i32) {
    %c0_i32 = arith.constant 0 : i32
    %c0_i32_0 = arith.constant 0 : i32
    %c0_i32_1 = arith.constant 0 : i32
    return %arg0, %c0_i32, %c0_i32_0 : i32, i32, i32
  }
}

</mosaic_0001>

<llo_original>
// kernel: vae_loss.1
$region0: #{vae_loss.1}
  #allocation0 [shape = 'u32[]', space=smem, size = 0x4, offset = 0x4, fixed_abs, tag = 'smem constant byte address 0x4 - core index']
  #allocation1 [shape = 'u32[144,128]{1,0:T(1,128)}', space=vmem, size = 0x12000, scoped, tag = 'internal scratch']
  #allocation2 [shape = 'f32[8,128]{1,0:T(8,128)}', space=vmem, size = 0x1000, scoped, tag = 'scratch operand']
  %s0 = inlined_call_operand.vmem [shape: f32[16,128], index: 0, kind: input, shape index: {}]
  %s1 = inlined_call_operand.vmem [shape: f32[16,128], index: 1, kind: input, shape index: {}]
  %s2 = inlined_call_operand.vmem [shape: f32[1,8,128], index: 2, kind: output, shape index: {}]
  %s3 = sld [smem:[#allocation0]]
  $region34: #{vae_loss.1} parent=0
    _
  %s5 = ssub.s32 1, %s3
  %s6 = scalar_select 0, %s5, %s3
  // Predicated region
  $region2: #{vae_loss.1} parent=0 // pred_check
    _
  $region3: #{vae_loss.1} parent=0 // pred_check_branch
    %8 = sbr.rel (0) target = $region5
  $region4: #{vae_loss.1} parent=0 // pred_region
    %s9 = sadd.s32 0, 0
    %p10 = scmp.lt.s32.totalorder %s9, 0
    %s11 = scalar_select %p10, %s9, 0
    %s12 = smul.u32 2, %s11
    %p13 = scmp.lt.s32.totalorder %s12, 1
    %s14 = scalar_select %p13, %s12, 1
    %s15 = smul.addr %s14, 8
    %s16 = scalar_lea.vmem %s0, %s15
    %s17 = sadd.s32 0, 0
    %p18 = scmp.lt.s32.totalorder %s17, 0
    %s19 = scalar_select %p18, %s17, 0
    %s20 = smul.u32 2, %s19
  $region5: #{vae_loss.1} parent=0 // pred_fallthru
    _
  // Predicated region
  $region6: #{vae_loss.1} parent=0 // pred_check
    _
  $region7: #{vae_loss.1} parent=0 // pred_check_branch
    %22 = sbr.rel (0) target = $region9
  $region8: #{vae_loss.1} parent=0 // pred_region
    %s23 = sadd.s32 0, 0
    %p24 = scmp.lt.s32.totalorder %s23, 0
    %s25 = scalar_select %p24, %s23, 0
    %s26 = smul.u32 2, %s25
    %p27 = scmp.lt.s32.totalorder %s26, 1
    %s28 = scalar_select %p27, %s26, 1
    %s29 = smul.addr %s28, 8
    %s30 = scalar_lea.vmem %s1, %s29
    %s31 = sadd.s32 0, 0
    %p32 = scmp.lt.s32.totalorder %s31, 0
    %s33 = scalar_select %p32, %s31, 0
    %s34 = smul.u32 2, %s33
  $region9: #{vae_loss.1} parent=0 // pred_fallthru
    _
  %s35 = sadd.s32 0, 0
  %p36 = scmp.lt.s32.totalorder %s35, 0
  %s37 = scalar_select %p36, %s35, 0
  %s38 = smul.u32 2, %s37
  %p39 = scmp.lt.s32.totalorder %s38, 1
  %s40 = scalar_select %p39, %s38, 1
  %s41 = smul.addr %s40, 8
  %s42 = scalar_lea.vmem %s0, %s41
  %s43 = sadd.s32 0, 0
  %p44 = scmp.lt.s32.totalorder %s43, 0
  %s45 = scalar_select %p44, %s43, 0
  %s46 = smul.u32 2, %s45
  %p47 = scmp.lt.s32.totalorder %s46, 1
  %s48 = scalar_select %p47, %s46, 1
  %s49 = smul.addr %s48, 8
  %s50 = scalar_lea.vmem %s1, %s49
  %s51 = sadd.s32 0, 0
  %p52 = scmp.lt.s32.totalorder %s51, 0
  %s53 = scalar_select %p52, %s51, 0
  %s54 = smul.u32 2, %s53
  %p55 = scmp.lt.s32.totalorder %s54, 1
  %s56 = scalar_select %p55, %s54, 1
  %s57 = smul.addr %s56, 8
  %s58 = scalar_lea.vmem %s0, %s57
  %s59 = sadd.s32 0, 0
  %p60 = scmp.lt.s32.totalorder %s59, 0
  %s61 = scalar_select %p60, %s59, 0
  %s62 = smul.u32 2, %s61
  %s63 = sadd.s32 0, 0
  %p64 = scmp.lt.s32.totalorder %s63, 0
  %s65 = scalar_select %p64, %s63, 0
  %s66 = smul.u32 2, %s65
  %p67 = scmp.lt.s32.totalorder %s66, 1
  %s68 = scalar_select %p67, %s66, 1
  %s69 = smul.addr %s68, 8
  %s70 = scalar_lea.vmem %s1, %s69
  %s71 = sadd.s32 0, 0
  %p72 = scmp.lt.s32.totalorder %s71, 0
  %s73 = scalar_select %p72, %s71, 0
  %s74 = smul.u32 2, %s73
  %p75 = scmp.eq.s32.totalorder 0, 0
  // Predicated region
  $region10: #{vae_loss.1} parent=0 // pred_check
    %p76 = pneg %p75
  $region11: #{vae_loss.1} parent=0 // pred_check_branch
    %78 = sbr.rel (%p76) target = $region13
  $region12: #{vae_loss.1} parent=0 // pred_region
    %79 = vst [vmem:[#allocation2] sm:$0xff] 0.0
  $region13: #{vae_loss.1} parent=0 // pred_fallthru
    _
  %s80 = sadd.s32 0, 0
  %s81 = smul.u32 %s80, 16
  %s82 = sadd.s32 %s81, 16
  %p83 = scmp.le.s32.totalorder %s82, 16
  // Predicated region
  $region14: #{vae_loss.1} parent=0 // pred_check
    %p84 = pneg %p83
  $region15: #{vae_loss.1} parent=0 // pred_check_branch
    %86 = sbr.rel (%p84) target = $region17
  $region16: #{vae_loss.1} parent=0 // pred_region
    %v87 = vld [vmem:[#allocation2] sm:$0xff]
    %v88 = vld [vmem:[%s58] sm:$0xff]
    %v89 = vld [vmem:[%s58 + $0x8] sm:$0xff]
    %v90 = vld [vmem:[%s70] sm:$0xff]
    %v91 = vld [vmem:[%s70 + $0x8] sm:$0xff]
    %v92 = vsub.f32 %v88, %v90
    %v93 = vsub.f32 %v89, %v91
    %v94 = vmul.f32 %v92, %v92
    %v95 = vmul.f32 %v93, %v93
    %v96 = vadd.f32 %v94, %v95
    %v97 = vadd.f32 %v87, %v96
    %98 = vst [vmem:[#allocation2] sm:$0xff] %v97
  $region17: #{vae_loss.1} parent=0 // pred_fallthru
    _
  %p99 = scmp.gt.s32.totalorder %s82, 16
  // Predicated region
  $region18: #{vae_loss.1} parent=0 // pred_check
    %p100 = pneg %p99
  $region19: #{vae_loss.1} parent=0 // pred_check_branch
    %102 = sbr.rel (%p100) target = $region21
  $region20: #{vae_loss.1} parent=0 // pred_region
    %v103 = vld [vmem:[#allocation2] sm:$0xff]
    %v104 = vld [vmem:[%s58] sm:$0xff]
    %v105 = vld [vmem:[%s58 + $0x8] sm:$0xff]
    %v106 = vld [vmem:[%s70] sm:$0xff]
    %v107 = vld [vmem:[%s70 + $0x8] sm:$0xff]
    %v108 = vsub.f32 %v104, %v106
    %v109 = vsub.f32 %v105, %v107
    %v110 = vmul.f32 %v108, %v108
    %v111 = vmul.f32 %v109, %v109
    %s112 = sadd.s32 %s81, 0
    %v113 = vlaneseq
    %v114 = vshrl.u32 %v113, 7
    %v115 = vadd.s32 %v114, 8
    %v116 = vstv %s112
    %v117 = vadd.s32 %v116, %v114
    %v118 = vadd.s32 %v116, %v115
    %vm119 = vcmp.lt.s32.totalorder %v117, 16
    %vm120 = vcmp.lt.s32.totalorder %v118, 16
    %v121 = vsel %vm119, %v110, 0.0
    %v122 = vsel %vm120, %v111, 0.0
    %v123 = vadd.f32 %v121, %v122
    %v124 = vadd.f32 %v103, %v123
    %125 = vst [vmem:[#allocation2] sm:$0xff] %v124
  $region21: #{vae_loss.1} parent=0 // pred_fallthru
    _
  // Predicated region
  $region22: #{vae_loss.1} parent=0 // pred_check
    %p126 = pneg %p75
  $region23: #{vae_loss.1} parent=0 // pred_check_branch
    %128 = sbr.rel (%p126) target = $region25
  $region24: #{vae_loss.1} parent=0 // pred_region
    %v129 = vld [vmem:[#allocation2] sm:$0xff]
    %130 = vst [vmem:[%s2] sm:$0xff] %v129
  $region25: #{vae_loss.1} parent=0 // pred_fallthru
    _
  // Predicated region
  $region26: #{vae_loss.1} parent=0 // pred_check
    _
  $region27: #{vae_loss.1} parent=0 // pred_check_branch
    %132 = sbr.rel (0) target = $region29
  $region28: #{vae_loss.1} parent=0 // pred_region
    _
  $region29: #{vae_loss.1} parent=0 // pred_fallthru
    _
  // Predicated region
  $region30: #{vae_loss.1} parent=0 // pred_check
    _
  $region31: #{vae_loss.1} parent=0 // pred_check_branch
    %134 = sbr.rel (0) target = $region33
  $region32: #{vae_loss.1} parent=0 // pred_region
    _
  $region33: #{vae_loss.1} parent=0 // pred_fallthru
    _

</llo_original>
